<compile_context>
chip_gen: v7x
topology: tpu7x:2x2x1
jax: 0.10.0
libtpu: 0.0.40
codegen_flags: <defaults>
</compile_context>

<pallas_src>
import functools
import numpy as np

import jax
import jax.numpy as jnp
from jax import lax
from jax.experimental import pallas as pl
from jax.experimental.pallas import tpu as pltpu


def _round_up(x, m):
    return ((x + m - 1) // m) * m


def _to_i32(v):
    """Python int (possibly >= 2**31) -> equivalent signed 32-bit value."""
    v &= 0xFFFFFFFF
    return v - (1 << 32) if v >= (1 << 31) else v


def _mix32(x):
    """lowbias32-style integer hash; int32 two's-complement == uint32 mod 2^32."""
    x = x ^ lax.shift_right_logical(x, 16)
    x = x * jnp.int32(_to_i32(0x7FEB352D))
    x = x ^ lax.shift_right_logical(x, 15)
    x = x * jnp.int32(_to_i32(0x846CA68B))
    x = x ^ lax.shift_right_logical(x, 16)
    return x


def _mlp_fused_kernel(seed_ref, x_ref, *refs, num_layers, tm,
                      dropout_threshold_i32, keep_scale, use_dropout):
    """One batch-tile of the full MLP: all layers, ReLU + dropout fused."""
    w_refs = refs[0:2 * num_layers:2]
    b_refs = refs[1:2 * num_layers:2]
    out_refs = refs[2 * num_layers:]

    h = x_ref[...].astype(jnp.float32)
    for l in range(num_layers):
        y = jnp.dot(h, w_refs[l][...], preferred_element_type=jnp.float32)
        y = y + b_refs[l][...]                 # bias is (1, N_pad), broadcasts
        if l != num_layers - 1:
            y = jnp.maximum(y, 0.0)            # ReLU in f32 (v5e-safe epilogue)
            if use_dropout:
                # Counter-based dropout mask (portable: pure VPU int ops).
                n_pad = y.shape[1]
                rows = lax.broadcasted_iota(jnp.int32, y.shape, 0)
                cols = lax.broadcasted_iota(jnp.int32, y.shape, 1)
                grow = pl.program_id(0) * tm + rows          # global row id
                elem = grow * jnp.int32(n_pad) + cols        # global element id
                layer_salt = jnp.int32(_to_i32((l + 1) * 0x9E3779B1))
                seed_term = seed_ref[0] * jnp.int32(_to_i32(0x3504F333))
                bits = _mix32(_mix32(elem + seed_term + layer_salt))
                keep = bits >= jnp.int32(dropout_threshold_i32)
                y = jnp.where(keep, y * jnp.float32(keep_scale), 0.0)
        out_refs[l][...] = y.astype(out_refs[l].dtype)
        h = y


class MLP:
    """JAX/Pallas mirror of the PyTorch MLP module (single fused kernel)."""

    def __init__(self, num_layers, input_dim, hidden_dim, output_dim,
                 dropout_ratio, key):
        self.num_layers = num_layers
        self.dropout_ratio = float(dropout_ratio)
        self.input_dim = input_dim
        if num_layers == 1:
            dims = [(input_dim, output_dim)]
        else:
            dims = [(input_dim, hidden_dim)]
            dims += [(hidden_dim, hidden_dim)] * (num_layers - 2)
            dims += [(hidden_dim, output_dim)]
        self.dims = dims

        # torch Linear init: U(-1/sqrt(fan_in), 1/sqrt(fan_in)); stored [in, out].
        self.params = []          # true (unpadded) params, for reference checks
        self.padded_params = []   # lane-dense, pre-cast params fed to the kernel
        for (fan_in, fan_out) in dims:
            key, kw, kb = jax.random.split(key, 3)
            bound = 1.0 / np.sqrt(fan_in)
            w = jax.random.uniform(kw, (fan_in, fan_out), jnp.float32, -bound, bound)
            b = jax.random.uniform(kb, (fan_out,), jnp.float32, -bound, bound)
            self.params.append((w, b))
            k_pad = _round_up(fan_in, 128)
            n_pad = _round_up(fan_out, 128)
            w_p = jnp.zeros((k_pad, n_pad), jnp.float32).at[:fan_in, :fan_out].set(w)
            b_p = jnp.zeros((1, n_pad), jnp.float32).at[0, :fan_out].set(b)
            self.padded_params.append((w_p, b_p))

    def __call__(self, feats, *, training=False, seed=0):
        M, in_dim = feats.shape
        assert in_dim == self.input_dim, (in_dim, self.input_dim)

        # Batch tile: multiple of 8 sublanes; cap at 256 rows per grid step.
        tm = 256 if M >= 256 else _round_up(M, 8)
        m_pad = _round_up(M, tm)
        in_pad = _round_up(in_dim, 128)
        x_p = jnp.zeros((m_pad, in_pad), feats.dtype).at[:M, :in_dim].set(feats)

        p = self.dropout_ratio
        use_dropout = bool(training) and p > 0.0 and self.num_layers > 1
        keep_scale = 1.0 / (1.0 - p) if p < 1.0 else 0.0
        # Signed-int32 threshold: keep iff hash_bits >= t, P(keep) = 1 - p.
        t = int(round(p * (2 ** 32))) - 2 ** 31
        dropout_threshold_i32 = max(-(2 ** 31), min(t, 2 ** 31 - 1))

        kernel = functools.partial(
            _mlp_fused_kernel,
            num_layers=self.num_layers,
            tm=tm,
            dropout_threshold_i32=dropout_threshold_i32,
            keep_scale=keep_scale,
            use_dropout=use_dropout,
        )

        in_specs = [
            pl.BlockSpec(memory_space=pltpu.MemorySpace.SMEM),       # per-call seed
            pl.BlockSpec((tm, in_pad), lambda i: (i, 0)),            # activations
        ]
        inputs = [jnp.asarray([seed], jnp.int32), x_p]
        out_shapes = []
        out_specs = []
        flops = 0
        bytes_accessed = x_p.size * 4
        for (w_p, b_p) in self.padded_params:
            k_pad, n_pad = w_p.shape
            in_specs.append(pl.BlockSpec((k_pad, n_pad), lambda i: (0, 0)))  # resident weight
            in_specs.append(pl.BlockSpec((1, n_pad), lambda i: (0, 0)))      # resident bias
            inputs += [w_p, b_p]
            out_shapes.append(jax.ShapeDtypeStruct((m_pad, n_pad), feats.dtype))
            out_specs.append(pl.BlockSpec((tm, n_pad), lambda i: (i, 0)))
            flops += 2 * m_pad * k_pad * n_pad
            bytes_accessed += (k_pad * n_pad + n_pad + m_pad * n_pad) * 4

        outs = pl.pallas_call(
            kernel,
            out_shape=tuple(out_shapes),
            grid_spec=pltpu.PrefetchScalarGridSpec(
                num_scalar_prefetch=0,
                grid=(m_pad // tm,),
                in_specs=in_specs,
                out_specs=tuple(out_specs),
            ),
            compiler_params=pltpu.CompilerParams(
                dimension_semantics=("parallel",),
            ),
            cost_estimate=pl.CostEstimate(
                flops=flops, transcendentals=0, bytes_accessed=bytes_accessed),
        )(*inputs)

        # Slice padding off in the wrapper (kernel stores stay lane-dense).
        h_list = [o[:M, :fan_out] for o, (_, fan_out) in zip(outs, self.dims)]
        return h_list, h_list[-1]


if __name__ == "__main__":
    num_layers, input_dim, hidden_dim, output_dim = 3, 32, 32, 16
    dropout_ratio = 0.1
    batch = 8

    mlp = MLP(num_layers, input_dim, hidden_dim, output_dim, dropout_ratio,
              key=jax.random.PRNGKey(0))
    x = jax.random.normal(jax.random.PRNGKey(1), (batch, input_dim), jnp.float32)

    # Eval-mode forward (dropout = identity, matching torch module.eval()).
    h_list, h = mlp(x, training=False)
    jax.block_until_ready(h)

    # Pure-JAX reference check (all h_list entries + final output).
    ref = x
    ref_list = []
    for l, (w, b) in enumerate(mlp.params):
        ref = ref @ w + b
        if l != num_layers - 1:
            ref = jnp.maximum(ref, 0.0)
        ref_list.append(ref)
    np.testing.assert_allclose(np.asarray(h), np.asarray(ref), rtol=1e-5, atol=1e-5)
    for hl, rl in zip(h_list, ref_list):
        np.testing.assert_allclose(np.asarray(hl), np.asarray(rl), rtol=1e-5, atol=1e-5)
    assert len(h_list) == num_layers
    assert h_list[-1].shape == (batch, output_dim)
    assert h_list[0].shape == (batch, hidden_dim)

    # Training-mode forward exercises the fused dropout path.
    h_list_tr, h_tr = mlp(x, training=True, seed=123)
    jax.block_until_ready(h_tr)
    assert h_tr.shape == (batch, output_dim)
    assert h_list_tr[0].shape == (batch, hidden_dim)

    print("KERNEL_OK")
</pallas_src>

<mosaic_0001>
module attributes {stable_mosaic.version = 11 : i64} {
  func.func @_mlp_fused_kernel(%arg0: i32, %arg1: memref<1xi32, #tpu.memory_space<smem>>, %arg2: memref<8x128xf32, #tpu.memory_space<vmem>>, %arg3: memref<128x128xf32, #tpu.memory_space<vmem>>, %arg4: memref<1x128xf32, #tpu.memory_space<vmem>>, %arg5: memref<128x128xf32, #tpu.memory_space<vmem>>, %arg6: memref<1x128xf32, #tpu.memory_space<vmem>>, %arg7: memref<128x128xf32, #tpu.memory_space<vmem>>, %arg8: memref<1x128xf32, #tpu.memory_space<vmem>>, %arg9: memref<8x128xf32, #tpu.memory_space<vmem>>, %arg10: memref<8x128xf32, #tpu.memory_space<vmem>>, %arg11: memref<8x128xf32, #tpu.memory_space<vmem>>) attributes {dimension_semantics = [#tpu.dimension_semantics<parallel>], iteration_bounds = array<i64: 1>, scalar_prefetch = 0 : i64, scratch_operands = 0 : i64, tpu.core_type = #tpu.core_type<tc>, window_params = [{transform_indices = @transform_0, window_bounds = array<i64: 1>}, {transform_indices = @transform_1, window_bounds = array<i64: 8, 128>}, {pipeline_mode = #tpu.pipeline_mode<synchronous>, transform_indices = @transform_2, window_bounds = array<i64: 128, 128>}, {pipeline_mode = #tpu.pipeline_mode<synchronous>, transform_indices = @transform_3, window_bounds = array<i64: 1, 128>}, {pipeline_mode = #tpu.pipeline_mode<synchronous>, transform_indices = @transform_4, window_bounds = array<i64: 128, 128>}, {pipeline_mode = #tpu.pipeline_mode<synchronous>, transform_indices = @transform_5, window_bounds = array<i64: 1, 128>}, {pipeline_mode = #tpu.pipeline_mode<synchronous>, transform_indices = @transform_6, window_bounds = array<i64: 128, 128>}, {pipeline_mode = #tpu.pipeline_mode<synchronous>, transform_indices = @transform_7, window_bounds = array<i64: 1, 128>}, {transform_indices = @transform_8, window_bounds = array<i64: 8, 128>}, {transform_indices = @transform_9, window_bounds = array<i64: 8, 128>}, {transform_indices = @transform_10, window_bounds = array<i64: 8, 128>}]} {
    %c0 = arith.constant 0 : index
    %c0_0 = arith.constant 0 : index
    %0 = vector.load %arg2[%c0, %c0_0] : memref<8x128xf32, #tpu.memory_space<vmem>>, vector<8x128xf32>
    %c0_1 = arith.constant 0 : index
    %c0_2 = arith.constant 0 : index
    %1 = vector.load %arg3[%c0_1, %c0_2] : memref<128x128xf32, #tpu.memory_space<vmem>>, vector<128x128xf32>
    %cst = arith.constant dense<0.000000e+00> : vector<8x128xf32>
    %2 = tpu.matmul %0, %1, %cst {dimension_numbers = #tpu.dot_dimension_numbers<[1], [0], [0], [1], [0, 0, 1, 1], [], []>} : vector<8x128xf32>, vector<128x128xf32>, vector<8x128xf32> -> vector<8x128xf32>
    %c0_3 = arith.constant 0 : index
    %c0_4 = arith.constant 0 : index
    %3 = vector.load %arg4[%c0_3, %c0_4] : memref<1x128xf32, #tpu.memory_space<vmem>>, vector<1x128xf32>
    %4 = vector.broadcast %3 : vector<1x128xf32> to vector<8x128xf32>
    %5 = arith.addf %2, %4 : vector<8x128xf32>
    %cst_5 = arith.constant 0.000000e+00 : f32
    %6 = vector.broadcast %cst_5 : f32 to vector<8x128xf32>
    %7 = arith.maximumf %5, %6 : vector<8x128xf32>
    %c0_6 = arith.constant 0 : index
    %c0_7 = arith.constant 0 : index
    %8 = vector.load %arg9[%c0_6, %c0_7] : memref<8x128xf32, #tpu.memory_space<vmem>>, vector<8x128xf32>
    tpu.vector_store %arg9[%c0_6, %c0_7], %7 {strides = array<i32>} : memref<8x128xf32, #tpu.memory_space<vmem>>, vector<8x128xf32>,
    %c0_8 = arith.constant 0 : index
    %c0_9 = arith.constant 0 : index
    %9 = vector.load %arg5[%c0_8, %c0_9] : memref<128x128xf32, #tpu.memory_space<vmem>>, vector<128x128xf32>
    %cst_10 = arith.constant dense<0.000000e+00> : vector<8x128xf32>
    %10 = tpu.matmul %7, %9, %cst_10 {dimension_numbers = #tpu.dot_dimension_numbers<[1], [0], [0], [1], [0, 0, 1, 1], [], []>} : vector<8x128xf32>, vector<128x128xf32>, vector<8x128xf32> -> vector<8x128xf32>
    %c0_11 = arith.constant 0 : index
    %c0_12 = arith.constant 0 : index
    %11 = vector.load %arg6[%c0_11, %c0_12] : memref<1x128xf32, #tpu.memory_space<vmem>>, vector<1x128xf32>
    %12 = vector.broadcast %11 : vector<1x128xf32> to vector<8x128xf32>
    %13 = arith.addf %10, %12 : vector<8x128xf32>
    %cst_13 = arith.constant 0.000000e+00 : f32
    %14 = vector.broadcast %cst_13 : f32 to vector<8x128xf32>
    %15 = arith.maximumf %13, %14 : vector<8x128xf32>
    %c0_14 = arith.constant 0 : index
    %c0_15 = arith.constant 0 : index
    %16 = vector.load %arg10[%c0_14, %c0_15] : memref<8x128xf32, #tpu.memory_space<vmem>>, vector<8x128xf32>
    tpu.vector_store %arg10[%c0_14, %c0_15], %15 {strides = array<i32>} : memref<8x128xf32, #tpu.memory_space<vmem>>, vector<8x128xf32>,
    %c0_16 = arith.constant 0 : index
    %c0_17 = arith.constant 0 : index
    %17 = vector.load %arg7[%c0_16, %c0_17] : memref<128x128xf32, #tpu.memory_space<vmem>>, vector<128x128xf32>
    %cst_18 = arith.constant dense<0.000000e+00> : vector<8x128xf32>
    %18 = tpu.matmul %15, %17, %cst_18 {dimension_numbers = #tpu.dot_dimension_numbers<[1], [0], [0], [1], [0, 0, 1, 1], [], []>} : vector<8x128xf32>, vector<128x128xf32>, vector<8x128xf32> -> vector<8x128xf32>
    %c0_19 = arith.constant 0 : index
    %c0_20 = arith.constant 0 : index
    %19 = vector.load %arg8[%c0_19, %c0_20] : memref<1x128xf32, #tpu.memory_space<vmem>>, vector<1x128xf32>
    %20 = vector.broadcast %19 : vector<1x128xf32> to vector<8x128xf32>
    %21 = arith.addf %18, %20 : vector<8x128xf32>
    %c0_21 = arith.constant 0 : index
    %c0_22 = arith.constant 0 : index
    %22 = vector.load %arg11[%c0_21, %c0_22] : memref<8x128xf32, #tpu.memory_space<vmem>>, vector<8x128xf32>
    tpu.vector_store %arg11[%c0_21, %c0_22], %21 {strides = array<i32>} : memref<8x128xf32, #tpu.memory_space<vmem>>, vector<8x128xf32>,
    return
  }
  func.func @transform_0(%arg0: i32) -> i32 {
    %c0_i32 = arith.constant 0 : i32
    %c0_i32_0 = arith.constant 0 : i32
    return %c0_i32 : i32
  }
  func.func @transform_1(%arg0: i32) -> (i32, i32) {
    %c0_i32 = arith.constant 0 : i32
    %c0_i32_0 = arith.constant 0 : i32
    return %arg0, %c0_i32 : i32, i32
  }
  func.func @transform_2(%arg0: i32) -> (i32, i32) {
    %c0_i32 = arith.constant 0 : i32
    %c0_i32_0 = arith.constant 0 : i32
    %c0_i32_1 = arith.constant 0 : i32
    return %c0_i32, %c0_i32_0 : i32, i32
  }
  func.func @transform_3(%arg0: i32) -> (i32, i32) {
    %c0_i32 = arith.constant 0 : i32
    %c0_i32_0 = arith.constant 0 : i32
    %c0_i32_1 = arith.constant 0 : i32
    return %c0_i32, %c0_i32_0 : i32, i32
  }
  func.func @transform_4(%arg0: i32) -> (i32, i32) {
    %c0_i32 = arith.constant 0 : i32
    %c0_i32_0 = arith.constant 0 : i32
    %c0_i32_1 = arith.constant 0 : i32
    return %c0_i32, %c0_i32_0 : i32, i32
  }
  func.func @transform_5(%arg0: i32) -> (i32, i32) {
    %c0_i32 = arith.constant 0 : i32
    %c0_i32_0 = arith.constant 0 : i32
    %c0_i32_1 = arith.constant 0 : i32
    return %c0_i32, %c0_i32_0 : i32, i32
  }
  func.func @transform_6(%arg0: i32) -> (i32, i32) {
    %c0_i32 = arith.constant 0 : i32
    %c0_i32_0 = arith.constant 0 : i32
    %c0_i32_1 = arith.constant 0 : i32
    return %c0_i32, %c0_i32_0 : i32, i32
  }
  func.func @transform_7(%arg0: i32) -> (i32, i32) {
    %c0_i32 = arith.constant 0 : i32
    %c0_i32_0 = arith.constant 0 : i32
    %c0_i32_1 = arith.constant 0 : i32
    return %c0_i32, %c0_i32_0 : i32, i32
  }
  func.func @transform_8(%arg0: i32) -> (i32, i32) {
    %c0_i32 = arith.constant 0 : i32
    %c0_i32_0 = arith.constant 0 : i32
    return %arg0, %c0_i32 : i32, i32
  }
  func.func @transform_9(%arg0: i32) -> (i32, i32) {
    %c0_i32 = arith.constant 0 : i32
    %c0_i32_0 = arith.constant 0 : i32
    return %arg0, %c0_i32 : i32, i32
  }
  func.func @transform_10(%arg0: i32) -> (i32, i32) {
    %c0_i32 = arith.constant 0 : i32
    %c0_i32_0 = arith.constant 0 : i32
    return %arg0, %c0_i32 : i32, i32
  }
}

</mosaic_0001>

<llo_original>
// kernel: tpu_custom_call.1
$region0: #{tpu_custom_call.1}
  #allocation0 [shape = 'u32[]', space=smem, size = 0x4, offset = 0x4, fixed_abs, tag = 'smem constant byte address 0x4 - core index']
  #allocation1 [shape = 'u32[144,128]{1,0:T(1,128)}', space=vmem, size = 0x12000, scoped, tag = 'internal scratch']
  #allocation2 [shape = 's32[1]{0:T(128)S(6)}', space=smem, size = 0x200, scoped, tag = 'scoped memory for tpu_custom_call.1']
  %s0 = inlined_call_operand.<no memory space> [shape: s32[1], index: 0, kind: input, shape index: {}]
  %s1 = inlined_call_operand.hbm [shape: f32[8,128], index: 1, kind: input, shape index: {}]
  %s2 = inlined_call_operand.hbm [shape: f32[128,128], index: 2, kind: input, shape index: {}]
  %s3 = inlined_call_operand.vmem [shape: f32[1,128], index: 3, kind: input, shape index: {}]
  %s4 = inlined_call_operand.hbm [shape: f32[128,128], index: 4, kind: input, shape index: {}]
  %s5 = inlined_call_operand.vmem [shape: f32[1,128], index: 5, kind: input, shape index: {}]
  %s6 = inlined_call_operand.hbm [shape: f32[128,128], index: 6, kind: input, shape index: {}]
  %s7 = inlined_call_operand.vmem [shape: f32[1,128], index: 7, kind: input, shape index: {}]
  %s8 = inlined_call_operand.hbm [shape: f32[8,128], index: 8, kind: output, shape index: {0}]
  %s9 = inlined_call_operand.hbm [shape: f32[8,128], index: 9, kind: output, shape index: {1}]
  %s10 = inlined_call_operand.hbm [shape: f32[8,128], index: 10, kind: output, shape index: {2}]
  %11 = xla_tuple %s8, %s9, %s10
  %s12 = sld [smem:[#allocation0]]
  $region74: #{tpu_custom_call.1} parent=0
    _
  %s14 = ssub.s32 1, %s12
  %s15 = scalar_select 0, %s14, %s12
  %16 = sst [smem:[#allocation2]] %s0
  $region1: #{tpu_custom_call.1} parent=0
    #allocation3 [shape = 'u8[4096]{0}', space=vmem, size = 0x1000, scoped, tag = 'input window, operand 1, single buffered']
    #allocation4 [shape = 's32[1]{0}', space=sflag, size = 0x4, scoped, tag = 'scoped memory for tpu_custom_call.1']
    #allocation5 [shape = 's32[1]{0}', space=sflag, size = 0x4, scoped, tag = 'scoped memory for tpu_custom_call.1']
    #allocation6 [shape = 'u8[65536]{0}', space=vmem, size = 0x10000, scoped, tag = 'input window, operand 2, single buffered']
    #allocation7 [shape = 's32[1]{0}', space=sflag, size = 0x4, scoped, tag = 'scoped memory for tpu_custom_call.1']
    #allocation8 [shape = 'u8[65536]{0}', space=vmem, size = 0x10000, scoped, tag = 'input window, operand 4, single buffered']
    #allocation9 [shape = 'u8[65536]{0}', space=vmem, size = 0x10000, scoped, tag = 'input window, operand 6, single buffered']
    #allocation10 [shape = 's32[1]{0}', space=sflag, size = 0x4, scoped, tag = 'scoped memory for tpu_custom_call.1']
    #allocation11 [shape = 'u8[4096]{0}', space=vmem, size = 0x1000, scoped, tag = 'output window, operand 0, single buffered']
    #allocation12 [shape = 'u8[4096]{0}', space=vmem, size = 0x1000, scoped, tag = 'output window, operand 1, single buffered']
    #allocation13 [shape = 's32[1]{0}', space=sflag, size = 0x4, scoped, tag = 'scoped memory for tpu_custom_call.1']
    #allocation14 [shape = 'u8[4096]{0}', space=vmem, size = 0x1000, scoped, tag = 'output window, operand 2, single buffered']
    %17 = vsyncpa [#allocation4], 0
    %18 = vsyncpa [#allocation7], 0
    %19 = vsyncpa [#allocation10], 0
    %20 = vsyncpa [#allocation5], 0
    %21 = vsyncpa [#allocation13], 0
    // Predicated region
    $region2: #{tpu_custom_call.1} parent=1 // pred_check
      _
    $region3: #{tpu_custom_call.1} parent=1 // pred_check_branch
      %23 = sbr.rel (0) target = $region5
    $region4: #{tpu_custom_call.1} parent=1 // pred_region
      _
    $region5: #{tpu_custom_call.1} parent=1 // pred_fallthru
      _
    // Predicated region
    $region6: #{tpu_custom_call.1} parent=1 // pred_check
      _
    $region7: #{tpu_custom_call.1} parent=1 // pred_check_branch
      %25 = sbr.rel (0) target = $region9
    $region8: #{tpu_custom_call.1} parent=1 // pred_region
      %s27 = ssub.s32 128, 128
      %28 = vsyncadd [#allocation4], %s27
      %s30 = sshll.u32 [#allocation3], 4
      %s31 = int_to_ptr.vmem [resolvable:$true] %s30
      %33 = dma.hbm_to_vmem [thread:$0]  %s1, 128, %s31, [#allocation4]
    $region9: #{tpu_custom_call.1} parent=1 // pred_fallthru
      _
    // Predicated region
    $region10: #{tpu_custom_call.1} parent=1 // pred_check
      _
    $region11: #{tpu_custom_call.1} parent=1 // pred_check_branch
      %35 = sbr.rel (0) target = $region13
    $region12: #{tpu_custom_call.1} parent=1 // pred_region
      %s37 = ssub.s32 2048, 2048
      %38 = vsyncadd [#allocation7], %s37
      %s39 = sshll.u32 [#allocation6], 4
      %s40 = int_to_ptr.vmem [resolvable:$true] %s39
      %45 = dma.hbm_to_vmem [thread:$0]  %s2, 2048, %s40, [#allocation7], 128, 128, 8
    $region13: #{tpu_custom_call.1} parent=1 // pred_fallthru
      _
    // Predicated region
    $region14: #{tpu_custom_call.1} parent=1 // pred_check
      _
    $region15: #{tpu_custom_call.1} parent=1 // pred_check_branch
      %47 = sbr.rel (0) target = $region17
    $region16: #{tpu_custom_call.1} parent=1 // pred_region
      _
    $region17: #{tpu_custom_call.1} parent=1 // pred_fallthru
      _
    // Predicated region
    $region18: #{tpu_custom_call.1} parent=1 // pred_check
      _
    $region19: #{tpu_custom_call.1} parent=1 // pred_check_branch
      %49 = sbr.rel (0) target = $region21
    $region20: #{tpu_custom_call.1} parent=1 // pred_region
      %s51 = ssub.s32 2048, 2048
      %52 = vsyncadd [#allocation7], %s51
      %s53 = sshll.u32 [#allocation8], 4
      %s54 = int_to_ptr.vmem [resolvable:$true] %s53
      %59 = dma.hbm_to_vmem [thread:$0]  %s4, 2048, %s54, [#allocation7], 128, 128, 8
    $region21: #{tpu_custom_call.1} parent=1 // pred_fallthru
      _
    // Predicated region
    $region22: #{tpu_custom_call.1} parent=1 // pred_check
      _
    $region23: #{tpu_custom_call.1} parent=1 // pred_check_branch
      %61 = sbr.rel (0) target = $region25
    $region24: #{tpu_custom_call.1} parent=1 // pred_region
      _
    $region25: #{tpu_custom_call.1} parent=1 // pred_fallthru
      _
    // Predicated region
    $region26: #{tpu_custom_call.1} parent=1 // pred_check
      _
    $region27: #{tpu_custom_call.1} parent=1 // pred_check_branch
      %63 = sbr.rel (0) target = $region29
    $region28: #{tpu_custom_call.1} parent=1 // pred_region
      %s65 = ssub.s32 2048, 2048
      %66 = vsyncadd [#allocation10], %s65
      %s67 = sshll.u32 [#allocation9], 4
      %s68 = int_to_ptr.vmem [resolvable:$true] %s67
      %73 = dma.hbm_to_vmem [thread:$0]  %s6, 2048, %s68, [#allocation10], 128, 128, 8
    $region29: #{tpu_custom_call.1} parent=1 // pred_fallthru
      _
    // Predicated region
    $region30: #{tpu_custom_call.1} parent=1 // pred_check
      _
    $region31: #{tpu_custom_call.1} parent=1 // pred_check_branch
      %75 = sbr.rel (0) target = $region33
    $region32: #{tpu_custom_call.1} parent=1 // pred_region
      _
    $region33: #{tpu_custom_call.1} parent=1 // pred_fallthru
      _
    // Predicated region
    $region34: #{tpu_custom_call.1} parent=1 // pred_check
      _
    $region35: #{tpu_custom_call.1} parent=1 // pred_check_branch
      %77 = sbr.rel (0) target = $region37
    $region36: #{tpu_custom_call.1} parent=1 // pred_region
      %78 = dma.done [#allocation4], 128
    $region37: #{tpu_custom_call.1} parent=1 // pred_fallthru
      _
    // Predicated region
    $region38: #{tpu_custom_call.1} parent=1 // pred_check
      _
    $region39: #{tpu_custom_call.1} parent=1 // pred_check_branch
      %80 = sbr.rel (0) target = $region41
    $region40: #{tpu_custom_call.1} parent=1 // pred_region
      %81 = dma.done [#allocation7], 2048
    $region41: #{tpu_custom_call.1} parent=1 // pred_fallthru
      _
    // Predicated region
    $region42: #{tpu_custom_call.1} parent=1 // pred_check
      _
    $region43: #{tpu_custom_call.1} parent=1 // pred_check_branch
      %83 = sbr.rel (0) target = $region45
    $region44: #{tpu_custom_call.1} parent=1 // pred_region
      %84 = dma.done [#allocation7], 2048
    $region45: #{tpu_custom_call.1} parent=1 // pred_fallthru
      _
    // Predicated region
    $region46: #{tpu_custom_call.1} parent=1 // pred_check
      _
    $region47: #{tpu_custom_call.1} parent=1 // pred_check_branch
      %86 = sbr.rel (0) target = $region49
    $region48: #{tpu_custom_call.1} parent=1 // pred_region
      %87 = dma.done [#allocation10], 2048
    $region49: #{tpu_custom_call.1} parent=1 // pred_fallthru
      _
    %v88 = vld [vmem:[#allocation3] sm:$0xff]
    %v89 = vld [vmem:[#allocation6] sm:$0xff]
    %v90 = vld [vmem:[#allocation6 + $0x8] sm:$0xff]
    %v91 = vld [vmem:[#allocation6 + $0x10] sm:$0xff]
    %v92 = vld [vmem:[#allocation6 + $0x18] sm:$0xff]
    %v93 = vld [vmem:[#allocation6 + $0x20] sm:$0xff]
    %v94 = vld [vmem:[#allocation6 + $0x28] sm:$0xff]
    %v95 = vld [vmem:[#allocation6 + $0x30] sm:$0xff]
    %v96 = vld [vmem:[#allocation6 + $0x38] sm:$0xff]
    %v97 = vld [vmem:[#allocation6 + $0x40] sm:$0xff]
    %v98 = vld [vmem:[#allocation6 + $0x48] sm:$0xff]
    %v99 = vld [vmem:[#allocation6 + $0x50] sm:$0xff]
    %v100 = vld [vmem:[#allocation6 + $0x58] sm:$0xff]
    %v101 = vld [vmem:[#allocation6 + $0x60] sm:$0xff]
    %v102 = vld [vmem:[#allocation6 + $0x68] sm:$0xff]
    %v103 = vld [vmem:[#allocation6 + $0x70] sm:$0xff]
    %v104 = vld [vmem:[#allocation6 + $0x78] sm:$0xff]
    %v105 = vld [vmem:[%s3] sm:$0x1]
    %v107 = vlaneseq
    %v108 = vshrl.u32 %v107, 7
    %v109 = vsub.s32 0, %v108
    %v110 = vrot.slane %v105, %v109
    %112 = vmatprep.subr.mxu0 0.0
    %113 = vmatpush1.msra.mxu0 %v89
    %114 = vmatprep.subr.mxu0 0.0
    %115 = vmatpush1.msra.mxu0 %v90
    %116 = vmatprep.subr.mxu0 0.0
    %117 = vmatpush1.msra.mxu0 %v91
    %118 = vmatprep.subr.mxu0 0.0
    %119 = vmatpush1.msra.mxu0 %v92
    %120 = vmatprep.subr.mxu0 0.0
    %121 = vmatpush1.msra.mxu0 %v93
    %122 = vmatprep.subr.mxu0 0.0
    %123 = vmatpush1.msra.mxu0 %v94
    %124 = vmatprep.subr.mxu0 0.0
    %125 = vmatpush1.msra.mxu0 %v95
    %126 = vmatprep.subr.mxu0 0.0
    %127 = vmatpush1.msra.mxu0 %v96
    %128 = vmatprep.subr.mxu0 0.0
    %129 = vmatpush1.msra.mxu0 %v97
    %130 = vmatprep.subr.mxu0 0.0
    %131 = vmatpush1.msra.mxu0 %v98
    %132 = vmatprep.subr.mxu0 0.0
    %133 = vmatpush1.msra.mxu0 %v99
    %134 = vmatprep.subr.mxu0 0.0
    %135 = vmatpush1.msra.mxu0 %v100
    %136 = vmatprep.subr.mxu0 0.0
    %137 = vmatpush1.msra.mxu0 %v101
    %138 = vmatprep.subr.mxu0 0.0
    %139 = vmatpush1.msra.mxu0 %v102
    %140 = vmatprep.subr.mxu0 0.0
    %141 = vmatpush1.msra.mxu0 %v103
    %142 = vmatprep.subr.mxu0 0.0
    %143 = vmatpush1.msra.mxu0 %v104
    %144 = vmatprep.subr.mxu0 0.0
    %145 = vmatpush1.msra.mxu0 0.0
    %146 = vmatprep.subr.mxu0 0.0
    %147 = vmatpush1.msra.mxu0 0.0
    %148 = vmatprep.subr.mxu0 0.0
    %149 = vmatpush1.msra.mxu0 0.0
    %150 = vmatprep.subr.mxu0 0.0
    %151 = vmatpush1.msra.mxu0 0.0
    %152 = vmatprep.subr.mxu0 0.0
    %153 = vmatpush1.msra.mxu0 0.0
    %154 = vmatprep.subr.mxu0 0.0
    %155 = vmatpush1.msra.mxu0 0.0
    %156 = vmatprep.subr.mxu0 0.0
    %157 = vmatpush1.msra.mxu0 0.0
    %158 = vmatprep.subr.mxu0 0.0
    %159 = vmatpush1.msra.mxu0 0.0
    %160 = vmatprep.subr.mxu0 0.0
    %161 = vmatpush1.msra.mxu0 0.0
    %162 = vmatprep.subr.mxu0 0.0
    %163 = vmatpush1.msra.mxu0 0.0
    %164 = vmatprep.subr.mxu0 0.0
    %165 = vmatpush1.msra.mxu0 0.0
    %166 = vmatprep.subr.mxu0 0.0
    %167 = vmatpush1.msra.mxu0 0.0
    %168 = vmatprep.subr.mxu0 0.0
    %169 = vmatpush1.msra.mxu0 0.0
    %170 = vmatprep.subr.mxu0 0.0
    %171 = vmatpush1.msra.mxu0 0.0
    %172 = vmatprep.subr.mxu0 0.0
    %173 = vmatpush1.msra.mxu0 0.0
    %174 = vmatprep.subr.mxu0 0.0
    %175 = vmatpush1.msra.mxu0 0.0
    %176 = vmatprep.mubr.f32.mxu0 0.0
    %177 = vmatmul.mubr.f32.gmra.mrb[0].mxu0 %v88
    %v178 = vpop.f32.mrb[0].mxu0
    %v179 = vadd.f32 %v110, %v178
    %v180 = vpop.f32.mrb[0].mxu0
    %181 = vdwg.mxu0
    %v182 = vmax.f32 %v179, 0.0
    %183 = vst [vmem:[#allocation11] sm:$0xff] %v182
    %v184 = vld [vmem:[#allocation8] sm:$0xff]
    %v185 = vld [vmem:[#allocation8 + $0x8] sm:$0xff]
    %v186 = vld [vmem:[#allocation8 + $0x10] sm:$0xff]
    %v187 = vld [vmem:[#allocation8 + $0x18] sm:$0xff]
    %v188 = vld [vmem:[#allocation8 + $0x20] sm:$0xff]
    %v189 = vld [vmem:[#allocation8 + $0x28] sm:$0xff]
    %v190 = vld [vmem:[#allocation8 + $0x30] sm:$0xff]
    %v191 = vld [vmem:[#allocation8 + $0x38] sm:$0xff]
    %v192 = vld [vmem:[#allocation8 + $0x40] sm:$0xff]
    %v193 = vld [vmem:[#allocation8 + $0x48] sm:$0xff]
    %v194 = vld [vmem:[#allocation8 + $0x50] sm:$0xff]
    %v195 = vld [vmem:[#allocation8 + $0x58] sm:$0xff]
    %v196 = vld [vmem:[#allocation8 + $0x60] sm:$0xff]
    %v197 = vld [vmem:[#allocation8 + $0x68] sm:$0xff]
    %v198 = vld [vmem:[#allocation8 + $0x70] sm:$0xff]
    %v199 = vld [vmem:[#allocation8 + $0x78] sm:$0xff]
    %v200 = vld [vmem:[%s5] sm:$0x1]
    %v202 = vlaneseq
    %v203 = vshrl.u32 %v202, 7
    %v204 = vsub.s32 0, %v203
    %v205 = vrot.slane %v200, %v204
    %207 = vmatprep.subr.mxu0 0.0
    %208 = vmatpush1.msra.mxu0 %v184
    %209 = vmatprep.subr.mxu0 0.0
    %210 = vmatpush1.msra.mxu0 %v185
    %211 = vmatprep.subr.mxu0 0.0
    %212 = vmatpush1.msra.mxu0 %v186
    %213 = vmatprep.subr.mxu0 0.0
    %214 = vmatpush1.msra.mxu0 %v187
    %215 = vmatprep.subr.mxu0 0.0
    %216 = vmatpush1.msra.mxu0 %v188
    %217 = vmatprep.subr.mxu0 0.0
    %218 = vmatpush1.msra.mxu0 %v189
    %219 = vmatprep.subr.mxu0 0.0
    %220 = vmatpush1.msra.mxu0 %v190
    %221 = vmatprep.subr.mxu0 0.0
    %222 = vmatpush1.msra.mxu0 %v191
    %223 = vmatprep.subr.mxu0 0.0
    %224 = vmatpush1.msra.mxu0 %v192
    %225 = vmatprep.subr.mxu0 0.0
    %226 = vmatpush1.msra.mxu0 %v193
    %227 = vmatprep.subr.mxu0 0.0
    %228 = vmatpush1.msra.mxu0 %v194
    %229 = vmatprep.subr.mxu0 0.0
    %230 = vmatpush1.msra.mxu0 %v195
    %231 = vmatprep.subr.mxu0 0.0
    %232 = vmatpush1.msra.mxu0 %v196
    %233 = vmatprep.subr.mxu0 0.0
    %234 = vmatpush1.msra.mxu0 %v197
    %235 = vmatprep.subr.mxu0 0.0
    %236 = vmatpush1.msra.mxu0 %v198
    %237 = vmatprep.subr.mxu0 0.0
    %238 = vmatpush1.msra.mxu0 %v199
    %239 = vmatprep.subr.mxu0 0.0
    %240 = vmatpush1.msra.mxu0 0.0
    %241 = vmatprep.subr.mxu0 0.0
    %242 = vmatpush1.msra.mxu0 0.0
    %243 = vmatprep.subr.mxu0 0.0
    %244 = vmatpush1.msra.mxu0 0.0
    %245 = vmatprep.subr.mxu0 0.0
    %246 = vmatpush1.msra.mxu0 0.0
    %247 = vmatprep.subr.mxu0 0.0
    %248 = vmatpush1.msra.mxu0 0.0
    %249 = vmatprep.subr.mxu0 0.0
    %250 = vmatpush1.msra.mxu0 0.0
    %251 = vmatprep.subr.mxu0 0.0
    %252 = vmatpush1.msra.mxu0 0.0
    %253 = vmatprep.subr.mxu0 0.0
    %254 = vmatpush1.msra.mxu0 0.0
    %255 = vmatprep.subr.mxu0 0.0
    %256 = vmatpush1.msra.mxu0 0.0
    %257 = vmatprep.subr.mxu0 0.0
    %258 = vmatpush1.msra.mxu0 0.0
    %259 = vmatprep.subr.mxu0 0.0
    %260 = vmatpush1.msra.mxu0 0.0
    %261 = vmatprep.subr.mxu0 0.0
    %262 = vmatpush1.msra.mxu0 0.0
    %263 = vmatprep.subr.mxu0 0.0
    %264 = vmatpush1.msra.mxu0 0.0
    %265 = vmatprep.subr.mxu0 0.0
    %266 = vmatpush1.msra.mxu0 0.0
    %267 = vmatprep.subr.mxu0 0.0
    %268 = vmatpush1.msra.mxu0 0.0
    %269 = vmatprep.subr.mxu0 0.0
    %270 = vmatpush1.msra.mxu0 0.0
    %271 = vmatprep.mubr.f32.mxu0 0.0
    %272 = vmatmul.mubr.f32.gmra.mrb[0].mxu0 %v182
    %v273 = vpop.f32.mrb[0].mxu0
    %v274 = vadd.f32 %v205, %v273
    %v275 = vpop.f32.mrb[0].mxu0
    %276 = vdwg.mxu0
    %v277 = vmax.f32 %v274, 0.0
    %278 = vst [vmem:[#allocation12] sm:$0xff] %v277
    %v279 = vld [vmem:[#allocation9] sm:$0xff]
    %v280 = vld [vmem:[#allocation9 + $0x8] sm:$0xff]
    %v281 = vld [vmem:[#allocation9 + $0x10] sm:$0xff]
    %v282 = vld [vmem:[#allocation9 + $0x18] sm:$0xff]
    %v283 = vld [vmem:[#allocation9 + $0x20] sm:$0xff]
    %v284 = vld [vmem:[#allocation9 + $0x28] sm:$0xff]
    %v285 = vld [vmem:[#allocation9 + $0x30] sm:$0xff]
    %v286 = vld [vmem:[#allocation9 + $0x38] sm:$0xff]
    %v287 = vld [vmem:[#allocation9 + $0x40] sm:$0xff]
    %v288 = vld [vmem:[#allocation9 + $0x48] sm:$0xff]
    %v289 = vld [vmem:[#allocation9 + $0x50] sm:$0xff]
    %v290 = vld [vmem:[#allocation9 + $0x58] sm:$0xff]
    %v291 = vld [vmem:[#allocation9 + $0x60] sm:$0xff]
    %v292 = vld [vmem:[#allocation9 + $0x68] sm:$0xff]
    %v293 = vld [vmem:[#allocation9 + $0x70] sm:$0xff]
    %v294 = vld [vmem:[#allocation9 + $0x78] sm:$0xff]
    %v295 = vld [vmem:[%s7] sm:$0x1]
    %v297 = vlaneseq
    %v298 = vshrl.u32 %v297, 7
    %v299 = vsub.s32 0, %v298
    %v300 = vrot.slane %v295, %v299
    %302 = vmatprep.subr.mxu0 0.0
    %303 = vmatpush1.msra.mxu0 %v279
    %304 = vmatprep.subr.mxu0 0.0
    %305 = vmatpush1.msra.mxu0 %v280
    %306 = vmatprep.subr.mxu0 0.0
    %307 = vmatpush1.msra.mxu0 %v281
    %308 = vmatprep.subr.mxu0 0.0
    %309 = vmatpush1.msra.mxu0 %v282
    %310 = vmatprep.subr.mxu0 0.0
    %311 = vmatpush1.msra.mxu0 %v283
    %312 = vmatprep.subr.mxu0 0.0
    %313 = vmatpush1.msra.mxu0 %v284
    %314 = vmatprep.subr.mxu0 0.0
    %315 = vmatpush1.msra.mxu0 %v285
    %316 = vmatprep.subr.mxu0 0.0
    %317 = vmatpush1.msra.mxu0 %v286
    %318 = vmatprep.subr.mxu0 0.0
    %319 = vmatpush1.msra.mxu0 %v287
    %320 = vmatprep.subr.mxu0 0.0
    %321 = vmatpush1.msra.mxu0 %v288
    %322 = vmatprep.subr.mxu0 0.0
    %323 = vmatpush1.msra.mxu0 %v289
    %324 = vmatprep.subr.mxu0 0.0
    %325 = vmatpush1.msra.mxu0 %v290
    %326 = vmatprep.subr.mxu0 0.0
    %327 = vmatpush1.msra.mxu0 %v291
    %328 = vmatprep.subr.mxu0 0.0
    %329 = vmatpush1.msra.mxu0 %v292
    %330 = vmatprep.subr.mxu0 0.0
    %331 = vmatpush1.msra.mxu0 %v293
    %332 = vmatprep.subr.mxu0 0.0
    %333 = vmatpush1.msra.mxu0 %v294
    %334 = vmatprep.subr.mxu0 0.0
    %335 = vmatpush1.msra.mxu0 0.0
    %336 = vmatprep.subr.mxu0 0.0
    %337 = vmatpush1.msra.mxu0 0.0
    %338 = vmatprep.subr.mxu0 0.0
    %339 = vmatpush1.msra.mxu0 0.0
    %340 = vmatprep.subr.mxu0 0.0
    %341 = vmatpush1.msra.mxu0 0.0
    %342 = vmatprep.subr.mxu0 0.0
    %343 = vmatpush1.msra.mxu0 0.0
    %344 = vmatprep.subr.mxu0 0.0
    %345 = vmatpush1.msra.mxu0 0.0
    %346 = vmatprep.subr.mxu0 0.0
    %347 = vmatpush1.msra.mxu0 0.0
    %348 = vmatprep.subr.mxu0 0.0
    %349 = vmatpush1.msra.mxu0 0.0
    %350 = vmatprep.subr.mxu0 0.0
    %351 = vmatpush1.msra.mxu0 0.0
    %352 = vmatprep.subr.mxu0 0.0
    %353 = vmatpush1.msra.mxu0 0.0
    %354 = vmatprep.subr.mxu0 0.0
    %355 = vmatpush1.msra.mxu0 0.0
    %356 = vmatprep.subr.mxu0 0.0
    %357 = vmatpush1.msra.mxu0 0.0
    %358 = vmatprep.subr.mxu0 0.0
    %359 = vmatpush1.msra.mxu0 0.0
    %360 = vmatprep.subr.mxu0 0.0
    %361 = vmatpush1.msra.mxu0 0.0
    %362 = vmatprep.subr.mxu0 0.0
    %363 = vmatpush1.msra.mxu0 0.0
    %364 = vmatprep.subr.mxu0 0.0
    %365 = vmatpush1.msra.mxu0 0.0
    %366 = vmatprep.mubr.f32.mxu0 0.0
    %367 = vmatmul.mubr.f32.gmra.mrb[0].mxu0 %v277
    %v368 = vpop.f32.mrb[0].mxu0
    %v369 = vadd.f32 %v300, %v368
    %v370 = vpop.f32.mrb[0].mxu0
    %371 = vdwg.mxu0
    %372 = vst [vmem:[#allocation14] sm:$0xff] %v369
    // Predicated region
    $region50: #{tpu_custom_call.1} parent=1 // pred_check
      _
    $region51: #{tpu_custom_call.1} parent=1 // pred_check_branch
      %374 = sbr.rel (0) target = $region53
    $region52: #{tpu_custom_call.1} parent=1 // pred_region
      %s376 = ssub.s32 128, 128
      %377 = vsyncadd [#allocation5], %s376
      %s379 = sshll.u32 [#allocation11], 4
      %s380 = int_to_ptr.vmem [resolvable:$true] %s379
      %382 = dma.vmem_to_hbm [thread:$0]  %s380, 128, %s8, [#allocation5]
    $region53: #{tpu_custom_call.1} parent=1 // pred_fallthru
      _
    // Predicated region
    $region54: #{tpu_custom_call.1} parent=1 // pred_check
      _
    $region55: #{tpu_custom_call.1} parent=1 // pred_check_branch
      %384 = sbr.rel (0) target = $region57
    $region56: #{tpu_custom_call.1} parent=1 // pred_region
      %s386 = ssub.s32 128, 128
      %387 = vsyncadd [#allocation13], %s386
      %s389 = sshll.u32 [#allocation12], 4
      %s390 = int_to_ptr.vmem [resolvable:$true] %s389
      %392 = dma.vmem_to_hbm [thread:$0]  %s390, 128, %s9, [#allocation13]
    $region57: #{tpu_custom_call.1} parent=1 // pred_fallthru
      _
    // Predicated region
    $region58: #{tpu_custom_call.1} parent=1 // pred_check
      _
    $region59: #{tpu_custom_call.1} parent=1 // pred_check_branch
      %394 = sbr.rel (0) target = $region61
    $region60: #{tpu_custom_call.1} parent=1 // pred_region
      %s396 = ssub.s32 128, 128
      %397 = vsyncadd [#allocation13], %s396
      %s399 = sshll.u32 [#allocation14], 4
      %s400 = int_to_ptr.vmem [resolvable:$true] %s399
      %402 = dma.vmem_to_hbm [thread:$0]  %s400, 128, %s10, [#allocation13]
    $region61: #{tpu_custom_call.1} parent=1 // pred_fallthru
      _
    // Predicated region
    $region62: #{tpu_custom_call.1} parent=1 // pred_check
      _
    $region63: #{tpu_custom_call.1} parent=1 // pred_check_branch
      %404 = sbr.rel (0) target = $region65
    $region64: #{tpu_custom_call.1} parent=1 // pred_region
      %405 = dma.done [#allocation5], 128
    $region65: #{tpu_custom_call.1} parent=1 // pred_fallthru
      _
    // Predicated region
    $region66: #{tpu_custom_call.1} parent=1 // pred_check
      _
    $region67: #{tpu_custom_call.1} parent=1 // pred_check_branch
      %407 = sbr.rel (0) target = $region69
    $region68: #{tpu_custom_call.1} parent=1 // pred_region
      %408 = dma.done [#allocation13], 128
    $region69: #{tpu_custom_call.1} parent=1 // pred_fallthru
      _
    // Predicated region
    $region70: #{tpu_custom_call.1} parent=1 // pred_check
      _
    $region71: #{tpu_custom_call.1} parent=1 // pred_check_branch
      %410 = sbr.rel (0) target = $region73
    $region72: #{tpu_custom_call.1} parent=1 // pred_region
      %411 = dma.done [#allocation13], 128
    $region73: #{tpu_custom_call.1} parent=1 // pred_fallthru
      _
    %412 = vsyncpa [#allocation4], 1
    %413 = vsyncpa [#allocation7], 1
    %414 = vsyncpa [#allocation10], 1
    %415 = vsyncpa [#allocation5], 1
    %416 = vsyncpa [#allocation13], 1

</llo_original>
